<compile_context>
chip_gen: v7x
topology: tpu7x:2x2x1
jax: 0.10.0
libtpu: 0.0.40
codegen_flags: <defaults>
</compile_context>

<pallas_src>
import functools
import math

import jax
import jax.numpy as jnp
from jax.experimental import pallas as pl
from jax.experimental.pallas import tpu as pltpu


N_QUANTILES = 100

# Hidden widths of the QRDQN MLP: net = [in->128, 128->64, 64->64],
# embedding_net = [64->128, 128->N*output_size].
_H1, _H2, _H3, _H4 = 128, 64, 64, 128
_LANE = 128
_SUBLANE = 8


def _round_up(x, m):
    return (x + m - 1) // m * m


def _qrdqn_kernel(x_ref,
                  w1_ref, b1_ref,
                  w2_ref, b2_ref,
                  w3_ref, b3_ref,
                  w4_ref, b4_ref,
                  w5_ref, b5_ref,
                  out_ref):
    # bf16 operands into the MXU, f32 accumulation; bias/ReLU in f32 (VPU).
    def dense(h_f32, w_ref, b_ref):
        return jnp.dot(h_f32.astype(jnp.bfloat16), w_ref[...],
                       preferred_element_type=jnp.float32) + b_ref[...]

    # net: Linear(in,128) -> ReLU -> Linear(128,64) -> ReLU -> Linear(64,64)
    h = jnp.maximum(dense(x_ref[...], w1_ref, b1_ref), 0.0)
    h = jnp.maximum(dense(h, w2_ref, b2_ref), 0.0)
    h = dense(h, w3_ref, b3_ref)
    # embedding_net: Linear(64,128) -> ReLU -> Linear(128, padded N*output_size)
    e = jnp.maximum(dense(h, w4_ref, b4_ref), 0.0)
    out_ref[...] = dense(e, w5_ref, b5_ref)


@functools.partial(jax.jit, static_argnums=(2, 3))
def _qrdqn_forward(x, params, output_size, block_b):
    B, input_size = x.shape
    flat_out = N_QUANTILES * output_size
    flat_out_padded = params["w5"].shape[1]          # lane-padded (512 for out=4)

    padded_B = _round_up(B, block_b)
    if padded_B != B:
        x = jnp.pad(x, ((0, padded_B - B), (0, 0)))
    grid = (padded_B // block_b,)

    def resident(arr):
        # Constant block index -> DMA'd once, stays resident across grid steps.
        return pl.BlockSpec(arr.shape, lambda i: (0, 0))

    in_specs = [pl.BlockSpec((block_b, input_size), lambda i: (i, 0))]
    args = [x]
    for name in ("w1", "b1", "w2", "b2", "w3", "b3", "w4", "b4", "w5", "b5"):
        in_specs.append(resident(params[name]))
        args.append(params[name])

    flops = 2 * padded_B * (input_size * _H1 + _H1 * _H2 + _H2 * _H3
                            + _H3 * _H4 + _H4 * flat_out_padded)
    bytes_accessed = (x.size * x.dtype.itemsize
                      + sum(int(params[k].size) * params[k].dtype.itemsize
                            for k in params)
                      + padded_B * flat_out_padded * 4)

    flat = pl.pallas_call(
        _qrdqn_kernel,
        out_shape=jax.ShapeDtypeStruct((padded_B, flat_out_padded), jnp.float32),
        grid=grid,
        in_specs=in_specs,
        out_specs=pl.BlockSpec((block_b, flat_out_padded), lambda i: (i, 0)),
        compiler_params=pltpu.CompilerParams(
            dimension_semantics=("parallel",)),
        cost_estimate=pl.CostEstimate(flops=flops, transcendentals=0,
                                      bytes_accessed=bytes_accessed),
    )(*args)

    # Drop batch padding + lane padding, then view(-1, N, output_size).
    return flat[:B, :flat_out].reshape(B, N_QUANTILES, output_size)


def qrdqn_forward(x, params, output_size, block_b=None):
    """Fused QR-DQN MLP. x: [B, input_size] f32 -> [B, N, output_size] f32."""
    B = x.shape[0]
    if block_b is None:
        # Tiny batches: one sublane-aligned block. Training batches: 256-row tiles.
        block_b = min(256, _round_up(max(B, 1), _SUBLANE))
    return _qrdqn_forward(x, params, output_size, block_b)


def init_params(key, input_size, output_size):
    """PyTorch-Linear-style init (U(-1/sqrt(fan_in), +)).

    Weights stored as [in, out] in bf16 (MXU-native), biases as [1, out] f32.
    The final layer is zero-padded to a multiple of 128 lanes.
    """
    flat_out = N_QUANTILES * output_size
    flat_out_padded = _round_up(flat_out, _LANE)
    dims = [
        (input_size, _H1),   # net[0]
        (_H1, _H2),          # net[2]
        (_H2, _H3),          # net[4]
        (_H3, _H4),          # embedding_net[0]
        (_H4, flat_out),     # embedding_net[2]
    ]
    params = {}
    keys = jax.random.split(key, 2 * len(dims))
    for i, (fan_in, fan_out) in enumerate(dims):
        bound = 1.0 / math.sqrt(fan_in)
        w = jax.random.uniform(keys[2 * i], (fan_in, fan_out),
                               minval=-bound, maxval=bound, dtype=jnp.float32)
        b = jax.random.uniform(keys[2 * i + 1], (1, fan_out),
                               minval=-bound, maxval=bound, dtype=jnp.float32)
        if i == len(dims) - 1 and fan_out != flat_out_padded:
            pad = flat_out_padded - fan_out
            w = jnp.pad(w, ((0, 0), (0, pad)))
            b = jnp.pad(b, ((0, 0), (0, pad)))
        params[f"w{i + 1}"] = w.astype(jnp.bfloat16)
        params[f"b{i + 1}"] = b  # keep biases in f32
    return params


def _reference(x, params, output_size):
    """Plain-JAX f32 reference using the same (bf16-rounded) weights."""
    flat_out = N_QUANTILES * output_size

    def lin(h, w, b):
        return h @ w.astype(jnp.float32) + b

    h = jnp.maximum(lin(x, params["w1"], params["b1"]), 0.0)
    h = jnp.maximum(lin(h, params["w2"], params["b2"]), 0.0)
    h = lin(h, params["w3"], params["b3"])
    e = jnp.maximum(lin(h, params["w4"], params["b4"]), 0.0)
    out = lin(e, params["w5"], params["b5"])[:, :flat_out]
    return out.reshape(-1, N_QUANTILES, output_size)


if __name__ == "__main__":
    input_size = 16
    output_size = 4

    key = jax.random.PRNGKey(0)
    pkey, xkey, xkey2 = jax.random.split(key, 3)
    params = init_params(pkey, input_size, output_size)

    # Tiny inference-style batch (choose_action path).
    x_small = jax.random.normal(xkey, (2, input_size), dtype=jnp.float32)
    q_small = jax.block_until_ready(qrdqn_forward(x_small, params, output_size))
    assert q_small.shape == (2, N_QUANTILES, output_size)
    assert q_small.dtype == jnp.float32
    ref_small = _reference(x_small, params, output_size)
    assert jnp.allclose(q_small, ref_small, atol=5e-2, rtol=5e-2)

    # Ragged multi-block batch exercising the grid + batch-padding path.
    x_big = jax.random.normal(xkey2, (40, input_size), dtype=jnp.float32)
    q_big = jax.block_until_ready(
        qrdqn_forward(x_big, params, output_size, block_b=16))
    assert q_big.shape == (40, N_QUANTILES, output_size)
    ref_big = _reference(x_big, params, output_size)
    assert jnp.allclose(q_big, ref_big, atol=5e-2, rtol=5e-2)

    # TODO(synk): optimizer (Adam) and epsilon-greedy choose_action are
    # host-side / training-time logic, intentionally left outside the kernel.
    print("KERNEL_OK")
</pallas_src>

<mosaic_0001>
module attributes {stable_mosaic.version = 11 : i64} {
  func.func @_qrdqn_kernel(%arg0: i32, %arg1: memref<8x16xf32, #tpu.memory_space<vmem>>, %arg2: memref<16x128xbf16, #tpu.memory_space<vmem>>, %arg3: memref<1x128xf32, #tpu.memory_space<vmem>>, %arg4: memref<128x64xbf16, #tpu.memory_space<vmem>>, %arg5: memref<1x64xf32, #tpu.memory_space<vmem>>, %arg6: memref<64x64xbf16, #tpu.memory_space<vmem>>, %arg7: memref<1x64xf32, #tpu.memory_space<vmem>>, %arg8: memref<64x128xbf16, #tpu.memory_space<vmem>>, %arg9: memref<1x128xf32, #tpu.memory_space<vmem>>, %arg10: memref<128x512xbf16, #tpu.memory_space<vmem>>, %arg11: memref<1x512xf32, #tpu.memory_space<vmem>>, %arg12: memref<8x512xf32, #tpu.memory_space<vmem>>) attributes {dimension_semantics = [#tpu.dimension_semantics<parallel>], iteration_bounds = array<i64: 1>, scalar_prefetch = 0 : i64, scratch_operands = 0 : i64, tpu.core_type = #tpu.core_type<tc>, window_params = [{transform_indices = @transform_0, window_bounds = array<i64: 8, 16>}, {pipeline_mode = #tpu.pipeline_mode<synchronous>, transform_indices = @transform_1, window_bounds = array<i64: 16, 128>}, {pipeline_mode = #tpu.pipeline_mode<synchronous>, transform_indices = @transform_2, window_bounds = array<i64: 1, 128>}, {pipeline_mode = #tpu.pipeline_mode<synchronous>, transform_indices = @transform_3, window_bounds = array<i64: 128, 64>}, {pipeline_mode = #tpu.pipeline_mode<synchronous>, transform_indices = @transform_4, window_bounds = array<i64: 1, 64>}, {pipeline_mode = #tpu.pipeline_mode<synchronous>, transform_indices = @transform_5, window_bounds = array<i64: 64, 64>}, {pipeline_mode = #tpu.pipeline_mode<synchronous>, transform_indices = @transform_6, window_bounds = array<i64: 1, 64>}, {pipeline_mode = #tpu.pipeline_mode<synchronous>, transform_indices = @transform_7, window_bounds = array<i64: 64, 128>}, {pipeline_mode = #tpu.pipeline_mode<synchronous>, transform_indices = @transform_8, window_bounds = array<i64: 1, 128>}, {pipeline_mode = #tpu.pipeline_mode<synchronous>, transform_indices = @transform_9, window_bounds = array<i64: 128, 512>}, {pipeline_mode = #tpu.pipeline_mode<synchronous>, transform_indices = @transform_10, window_bounds = array<i64: 1, 512>}, {transform_indices = @transform_11, window_bounds = array<i64: 8, 512>}]} {
    %c0 = arith.constant 0 : index
    %c0_0 = arith.constant 0 : index
    %0 = vector.load %arg1[%c0, %c0_0] : memref<8x16xf32, #tpu.memory_space<vmem>>, vector<8x16xf32>
    %1 = arith.truncf %0 : vector<8x16xf32> to vector<8x16xbf16>
    %c0_1 = arith.constant 0 : index
    %c0_2 = arith.constant 0 : index
    %2 = vector.load %arg2[%c0_1, %c0_2] : memref<16x128xbf16, #tpu.memory_space<vmem>>, vector<16x128xbf16>
    %cst = arith.constant dense<0.000000e+00> : vector<8x128xf32>
    %3 = tpu.matmul %1, %2, %cst {dimension_numbers = #tpu.dot_dimension_numbers<[1], [0], [0], [1], [0, 0, 1, 1], [], []>} : vector<8x16xbf16>, vector<16x128xbf16>, vector<8x128xf32> -> vector<8x128xf32>
    %c0_3 = arith.constant 0 : index
    %c0_4 = arith.constant 0 : index
    %4 = vector.load %arg3[%c0_3, %c0_4] : memref<1x128xf32, #tpu.memory_space<vmem>>, vector<1x128xf32>
    %5 = vector.broadcast %4 : vector<1x128xf32> to vector<8x128xf32>
    %6 = arith.addf %3, %5 : vector<8x128xf32>
    %cst_5 = arith.constant 0.000000e+00 : f32
    %7 = vector.broadcast %cst_5 : f32 to vector<8x128xf32>
    %8 = arith.maximumf %6, %7 : vector<8x128xf32>
    %9 = arith.truncf %8 : vector<8x128xf32> to vector<8x128xbf16>
    %c0_6 = arith.constant 0 : index
    %c0_7 = arith.constant 0 : index
    %10 = vector.load %arg4[%c0_6, %c0_7] : memref<128x64xbf16, #tpu.memory_space<vmem>>, vector<128x64xbf16>
    %cst_8 = arith.constant dense<0.000000e+00> : vector<8x64xf32>
    %11 = tpu.matmul %9, %10, %cst_8 {dimension_numbers = #tpu.dot_dimension_numbers<[1], [0], [0], [1], [0, 0, 1, 1], [], []>} : vector<8x128xbf16>, vector<128x64xbf16>, vector<8x64xf32> -> vector<8x64xf32>
    %c0_9 = arith.constant 0 : index
    %c0_10 = arith.constant 0 : index
    %12 = vector.load %arg5[%c0_9, %c0_10] : memref<1x64xf32, #tpu.memory_space<vmem>>, vector<1x64xf32>
    %13 = vector.broadcast %12 : vector<1x64xf32> to vector<8x64xf32>
    %14 = arith.addf %11, %13 : vector<8x64xf32>
    %cst_11 = arith.constant 0.000000e+00 : f32
    %15 = vector.broadcast %cst_11 : f32 to vector<8x64xf32>
    %16 = arith.maximumf %14, %15 : vector<8x64xf32>
    %17 = arith.truncf %16 : vector<8x64xf32> to vector<8x64xbf16>
    %c0_12 = arith.constant 0 : index
    %c0_13 = arith.constant 0 : index
    %18 = vector.load %arg6[%c0_12, %c0_13] : memref<64x64xbf16, #tpu.memory_space<vmem>>, vector<64x64xbf16>
    %cst_14 = arith.constant dense<0.000000e+00> : vector<8x64xf32>
    %19 = tpu.matmul %17, %18, %cst_14 {dimension_numbers = #tpu.dot_dimension_numbers<[1], [0], [0], [1], [0, 0, 1, 1], [], []>} : vector<8x64xbf16>, vector<64x64xbf16>, vector<8x64xf32> -> vector<8x64xf32>
    %c0_15 = arith.constant 0 : index
    %c0_16 = arith.constant 0 : index
    %20 = vector.load %arg7[%c0_15, %c0_16] : memref<1x64xf32, #tpu.memory_space<vmem>>, vector<1x64xf32>
    %21 = vector.broadcast %20 : vector<1x64xf32> to vector<8x64xf32>
    %22 = arith.addf %19, %21 : vector<8x64xf32>
    %23 = arith.truncf %22 : vector<8x64xf32> to vector<8x64xbf16>
    %c0_17 = arith.constant 0 : index
    %c0_18 = arith.constant 0 : index
    %24 = vector.load %arg8[%c0_17, %c0_18] : memref<64x128xbf16, #tpu.memory_space<vmem>>, vector<64x128xbf16>
    %cst_19 = arith.constant dense<0.000000e+00> : vector<8x128xf32>
    %25 = tpu.matmul %23, %24, %cst_19 {dimension_numbers = #tpu.dot_dimension_numbers<[1], [0], [0], [1], [0, 0, 1, 1], [], []>} : vector<8x64xbf16>, vector<64x128xbf16>, vector<8x128xf32> -> vector<8x128xf32>
    %c0_20 = arith.constant 0 : index
    %c0_21 = arith.constant 0 : index
    %26 = vector.load %arg9[%c0_20, %c0_21] : memref<1x128xf32, #tpu.memory_space<vmem>>, vector<1x128xf32>
    %27 = vector.broadcast %26 : vector<1x128xf32> to vector<8x128xf32>
    %28 = arith.addf %25, %27 : vector<8x128xf32>
    %cst_22 = arith.constant 0.000000e+00 : f32
    %29 = vector.broadcast %cst_22 : f32 to vector<8x128xf32>
    %30 = arith.maximumf %28, %29 : vector<8x128xf32>
    %31 = arith.truncf %30 : vector<8x128xf32> to vector<8x128xbf16>
    %c0_23 = arith.constant 0 : index
    %c0_24 = arith.constant 0 : index
    %32 = vector.load %arg10[%c0_23, %c0_24] : memref<128x512xbf16, #tpu.memory_space<vmem>>, vector<128x512xbf16>
    %cst_25 = arith.constant dense<0.000000e+00> : vector<8x512xf32>
    %33 = tpu.matmul %31, %32, %cst_25 {dimension_numbers = #tpu.dot_dimension_numbers<[1], [0], [0], [1], [0, 0, 1, 1], [], []>} : vector<8x128xbf16>, vector<128x512xbf16>, vector<8x512xf32> -> vector<8x512xf32>
    %c0_26 = arith.constant 0 : index
    %c0_27 = arith.constant 0 : index
    %34 = vector.load %arg11[%c0_26, %c0_27] : memref<1x512xf32, #tpu.memory_space<vmem>>, vector<1x512xf32>
    %35 = vector.broadcast %34 : vector<1x512xf32> to vector<8x512xf32>
    %36 = arith.addf %33, %35 : vector<8x512xf32>
    %c0_28 = arith.constant 0 : index
    %c0_29 = arith.constant 0 : index
    %37 = vector.load %arg12[%c0_28, %c0_29] : memref<8x512xf32, #tpu.memory_space<vmem>>, vector<8x512xf32>
    tpu.vector_store %arg12[%c0_28, %c0_29], %36 {strides = array<i32>} : memref<8x512xf32, #tpu.memory_space<vmem>>, vector<8x512xf32>,
    return
  }
  func.func @transform_0(%arg0: i32) -> (i32, i32) {
    %c0_i32 = arith.constant 0 : i32
    %c0_i32_0 = arith.constant 0 : i32
    return %arg0, %c0_i32 : i32, i32
  }
  func.func @transform_1(%arg0: i32) -> (i32, i32) {
    %c0_i32 = arith.constant 0 : i32
    %c0_i32_0 = arith.constant 0 : i32
    %c0_i32_1 = arith.constant 0 : i32
    return %c0_i32, %c0_i32_0 : i32, i32
  }
  func.func @transform_2(%arg0: i32) -> (i32, i32) {
    %c0_i32 = arith.constant 0 : i32
    %c0_i32_0 = arith.constant 0 : i32
    %c0_i32_1 = arith.constant 0 : i32
    return %c0_i32, %c0_i32_0 : i32, i32
  }
  func.func @transform_3(%arg0: i32) -> (i32, i32) {
    %c0_i32 = arith.constant 0 : i32
    %c0_i32_0 = arith.constant 0 : i32
    %c0_i32_1 = arith.constant 0 : i32
    return %c0_i32, %c0_i32_0 : i32, i32
  }
  func.func @transform_4(%arg0: i32) -> (i32, i32) {
    %c0_i32 = arith.constant 0 : i32
    %c0_i32_0 = arith.constant 0 : i32
    %c0_i32_1 = arith.constant 0 : i32
    return %c0_i32, %c0_i32_0 : i32, i32
  }
  func.func @transform_5(%arg0: i32) -> (i32, i32) {
    %c0_i32 = arith.constant 0 : i32
    %c0_i32_0 = arith.constant 0 : i32
    %c0_i32_1 = arith.constant 0 : i32
    return %c0_i32, %c0_i32_0 : i32, i32
  }
  func.func @transform_6(%arg0: i32) -> (i32, i32) {
    %c0_i32 = arith.constant 0 : i32
    %c0_i32_0 = arith.constant 0 : i32
    %c0_i32_1 = arith.constant 0 : i32
    return %c0_i32, %c0_i32_0 : i32, i32
  }
  func.func @transform_7(%arg0: i32) -> (i32, i32) {
    %c0_i32 = arith.constant 0 : i32
    %c0_i32_0 = arith.constant 0 : i32
    %c0_i32_1 = arith.constant 0 : i32
    return %c0_i32, %c0_i32_0 : i32, i32
  }
  func.func @transform_8(%arg0: i32) -> (i32, i32) {
    %c0_i32 = arith.constant 0 : i32
    %c0_i32_0 = arith.constant 0 : i32
    %c0_i32_1 = arith.constant 0 : i32
    return %c0_i32, %c0_i32_0 : i32, i32
  }
  func.func @transform_9(%arg0: i32) -> (i32, i32) {
    %c0_i32 = arith.constant 0 : i32
    %c0_i32_0 = arith.constant 0 : i32
    %c0_i32_1 = arith.constant 0 : i32
    return %c0_i32, %c0_i32_0 : i32, i32
  }
  func.func @transform_10(%arg0: i32) -> (i32, i32) {
    %c0_i32 = arith.constant 0 : i32
    %c0_i32_0 = arith.constant 0 : i32
    %c0_i32_1 = arith.constant 0 : i32
    return %c0_i32, %c0_i32_0 : i32, i32
  }
  func.func @transform_11(%arg0: i32) -> (i32, i32) {
    %c0_i32 = arith.constant 0 : i32
    %c0_i32_0 = arith.constant 0 : i32
    return %arg0, %c0_i32 : i32, i32
  }
}

</mosaic_0001>

<llo_original>
// kernel: _qrdqn_forward.1
$region0: #{_qrdqn_forward.1}
  #allocation0 [shape = 'u32[]', space=smem, size = 0x4, offset = 0x4, fixed_abs, tag = 'smem constant byte address 0x4 - core index']
  #allocation1 [shape = 'u32[144,128]{1,0:T(1,128)}', space=vmem, size = 0x12000, scoped, tag = 'internal scratch']
  %s0 = inlined_call_operand.vmem [shape: f32[8,16], index: 0, kind: input, shape index: {}]
  %s1 = inlined_call_operand.vmem [shape: bf16[16,128], index: 1, kind: input, shape index: {}]
  %s2 = inlined_call_operand.vmem [shape: f32[1,128], index: 2, kind: input, shape index: {}]
  %s3 = inlined_call_operand.vmem [shape: bf16[128,64], index: 3, kind: input, shape index: {}]
  %s4 = inlined_call_operand.vmem [shape: f32[1,64], index: 4, kind: input, shape index: {}]
  %s5 = inlined_call_operand.vmem [shape: bf16[64,64], index: 5, kind: input, shape index: {}]
  %s6 = inlined_call_operand.vmem [shape: f32[1,64], index: 6, kind: input, shape index: {}]
  %s7 = inlined_call_operand.vmem [shape: bf16[64,128], index: 7, kind: input, shape index: {}]
  %s8 = inlined_call_operand.vmem [shape: f32[1,128], index: 8, kind: input, shape index: {}]
  %s9 = inlined_call_operand.hbm [shape: bf16[128,512], index: 9, kind: input, shape index: {}]
  %s10 = inlined_call_operand.vmem [shape: f32[1,512], index: 10, kind: input, shape index: {}]
  %s11 = inlined_call_operand.vmem [shape: f32[8,512], index: 11, kind: output, shape index: {}]
  %s12 = sld [smem:[#allocation0]]
  $region58: #{_qrdqn_forward.1} parent=0
    _
  %s14 = ssub.s32 1, %s12
  %s15 = scalar_select 0, %s14, %s12
  $region1: #{_qrdqn_forward.1} parent=0
    #allocation2 [shape = 'u8[131072]{0}', space=vmem, size = 0x20000, scoped, tag = 'input window, operand 9, single buffered']
    #allocation3 [shape = 's32[1]{0}', space=sflag, size = 0x4, scoped, tag = 'scoped memory for _qrdqn_forward.1']
    %16 = vsyncpa [#allocation3], 0
    // Predicated region
    $region2: #{_qrdqn_forward.1} parent=1 // pred_check
      _
    $region3: #{_qrdqn_forward.1} parent=1 // pred_check_branch
      %18 = sbr.rel (0) target = $region5
    $region4: #{_qrdqn_forward.1} parent=1 // pred_region
      _
    $region5: #{_qrdqn_forward.1} parent=1 // pred_fallthru
      _
    // Predicated region
    $region6: #{_qrdqn_forward.1} parent=1 // pred_check
      _
    $region7: #{_qrdqn_forward.1} parent=1 // pred_check_branch
      %20 = sbr.rel (0) target = $region9
    $region8: #{_qrdqn_forward.1} parent=1 // pred_region
      _
    $region9: #{_qrdqn_forward.1} parent=1 // pred_fallthru
      _
    // Predicated region
    $region10: #{_qrdqn_forward.1} parent=1 // pred_check
      _
    $region11: #{_qrdqn_forward.1} parent=1 // pred_check_branch
      %22 = sbr.rel (0) target = $region13
    $region12: #{_qrdqn_forward.1} parent=1 // pred_region
      _
    $region13: #{_qrdqn_forward.1} parent=1 // pred_fallthru
      _
    // Predicated region
    $region14: #{_qrdqn_forward.1} parent=1 // pred_check
      _
    $region15: #{_qrdqn_forward.1} parent=1 // pred_check_branch
      %24 = sbr.rel (0) target = $region17
    $region16: #{_qrdqn_forward.1} parent=1 // pred_region
      _
    $region17: #{_qrdqn_forward.1} parent=1 // pred_fallthru
      _
    // Predicated region
    $region18: #{_qrdqn_forward.1} parent=1 // pred_check
      _
    $region19: #{_qrdqn_forward.1} parent=1 // pred_check_branch
      %26 = sbr.rel (0) target = $region21
    $region20: #{_qrdqn_forward.1} parent=1 // pred_region
      _
    $region21: #{_qrdqn_forward.1} parent=1 // pred_fallthru
      _
    // Predicated region
    $region22: #{_qrdqn_forward.1} parent=1 // pred_check
      _
    $region23: #{_qrdqn_forward.1} parent=1 // pred_check_branch
      %28 = sbr.rel (0) target = $region25
    $region24: #{_qrdqn_forward.1} parent=1 // pred_region
      _
    $region25: #{_qrdqn_forward.1} parent=1 // pred_fallthru
      _
    // Predicated region
    $region26: #{_qrdqn_forward.1} parent=1 // pred_check
      _
    $region27: #{_qrdqn_forward.1} parent=1 // pred_check_branch
      %30 = sbr.rel (0) target = $region29
    $region28: #{_qrdqn_forward.1} parent=1 // pred_region
      _
    $region29: #{_qrdqn_forward.1} parent=1 // pred_fallthru
      _
    // Predicated region
    $region30: #{_qrdqn_forward.1} parent=1 // pred_check
      _
    $region31: #{_qrdqn_forward.1} parent=1 // pred_check_branch
      %32 = sbr.rel (0) target = $region33
    $region32: #{_qrdqn_forward.1} parent=1 // pred_region
      _
    $region33: #{_qrdqn_forward.1} parent=1 // pred_fallthru
      _
    // Predicated region
    $region34: #{_qrdqn_forward.1} parent=1 // pred_check
      _
    $region35: #{_qrdqn_forward.1} parent=1 // pred_check_branch
      %34 = sbr.rel (0) target = $region37
    $region36: #{_qrdqn_forward.1} parent=1 // pred_region
      _
    $region37: #{_qrdqn_forward.1} parent=1 // pred_fallthru
      _
    // Predicated region
    $region38: #{_qrdqn_forward.1} parent=1 // pred_check
      _
    $region39: #{_qrdqn_forward.1} parent=1 // pred_check_branch
      %36 = sbr.rel (0) target = $region41
    $region40: #{_qrdqn_forward.1} parent=1 // pred_region
      %s38 = ssub.s32 4096, 4096
      %39 = vsyncadd [#allocation3], %s38
      %s40 = sshll.u32 [#allocation2], 4
      %s41 = int_to_ptr.vmem [resolvable:$true] %s40
      %46 = dma.hbm_to_vmem [thread:$0]  %s9, 4096, %s41, [#allocation3], 256, 256, 16
    $region41: #{_qrdqn_forward.1} parent=1 // pred_fallthru
      _
    // Predicated region
    $region42: #{_qrdqn_forward.1} parent=1 // pred_check
      _
    $region43: #{_qrdqn_forward.1} parent=1 // pred_check_branch
      %48 = sbr.rel (0) target = $region45
    $region44: #{_qrdqn_forward.1} parent=1 // pred_region
      _
    $region45: #{_qrdqn_forward.1} parent=1 // pred_fallthru
      _
    // Predicated region
    $region46: #{_qrdqn_forward.1} parent=1 // pred_check
      _
    $region47: #{_qrdqn_forward.1} parent=1 // pred_check_branch
      %50 = sbr.rel (0) target = $region49
    $region48: #{_qrdqn_forward.1} parent=1 // pred_region
      %51 = dma.done [#allocation3], 4096
    $region49: #{_qrdqn_forward.1} parent=1 // pred_fallthru
      _
    %v53 = vld [vmem:[%s0] sm:$0xff]
    %v54 = vpack.c.bf16 %v53, %v53
    %v55 = vld [vmem:[%s1] sm:$0xf]
    %v56 = vld [vmem:[%s1 + $0x4] sm:$0xf]
    %v57 = vld [vmem:[%s2] sm:$0x1]
    %v59 = vlaneseq
    %v60 = vshrl.u32 %v59, 7
    %v61 = vsub.s32 0, %v60
    %v62 = vrot.slane %v57, %v61
    %v66 = vunpack.c.l.b16 %v55
    %v67 = vunpack.c.l.b16 %v56
    %v68 = vpack.c.b16 %v67, %v66
    %vm70 = vcmask 130048
    %v72 = vsel %vm70, %v54, 0
    %74 = vmatprep.subr.bf16.mxu0 0
    %75 = vmatpush1.bf16.msra.mxu0 %v68
    %76 = vmatprep.subr.bf16.mxu0 0
    %77 = vmatpush1.bf16.msra.mxu0 0
    %78 = vmatprep.subr.bf16.mxu0 0
    %79 = vmatpush1.bf16.msra.mxu0 0
    %80 = vmatprep.subr.bf16.mxu0 0
    %81 = vmatpush1.bf16.msra.mxu0 0
    %82 = vmatprep.subr.bf16.mxu0 0
    %83 = vmatpush1.bf16.msra.mxu0 0
    %84 = vmatprep.subr.bf16.mxu0 0
    %85 = vmatpush1.bf16.msra.mxu0 0
    %86 = vmatprep.subr.bf16.mxu0 0
    %87 = vmatpush1.bf16.msra.mxu0 0
    %88 = vmatprep.subr.bf16.mxu0 0
    %89 = vmatpush1.bf16.msra.mxu0 0
    %90 = vmatprep.subr.bf16.mxu0 0
    %91 = vmatpush1.bf16.msra.mxu0 0
    %92 = vmatprep.subr.bf16.mxu0 0
    %93 = vmatpush1.bf16.msra.mxu0 0
    %94 = vmatprep.subr.bf16.mxu0 0
    %95 = vmatpush1.bf16.msra.mxu0 0
    %96 = vmatprep.subr.bf16.mxu0 0
    %97 = vmatpush1.bf16.msra.mxu0 0
    %98 = vmatprep.subr.bf16.mxu0 0
    %99 = vmatpush1.bf16.msra.mxu0 0
    %100 = vmatprep.subr.bf16.mxu0 0
    %101 = vmatpush1.bf16.msra.mxu0 0
    %102 = vmatprep.subr.bf16.mxu0 0
    %103 = vmatpush1.bf16.msra.mxu0 0
    %104 = vmatprep.subr.bf16.mxu0 0
    %105 = vmatpush1.bf16.msra.mxu0 0
    %106 = vmatprep.mubr.bf16.mxu0 0
    %107 = vmatmul.mubr.bf16.gmra.mrb[0].mxu0 %v72
    %v108 = vpop.f32.mrb[0].mxu0
    %v109 = vadd.f32 %v62, %v108
    %v110 = vpop.f32.mrb[0].mxu0
    %v111 = vpop.f32.mrb[0].mxu0
    %v112 = vpop.f32.mrb[0].mxu0
    %113 = vdwg.mxu0
    %v114 = vmax.f32 %v109, 0.0
    %v115 = vpack.c.bf16 %v114, %v114
    %v116 = vld [vmem:[%s3] sm:$0xf]
    %v117 = vld [vmem:[%s3 + $0x4] sm:$0xf]
    %v118 = vld [vmem:[%s3 + $0x8] sm:$0xf]
    %v119 = vld [vmem:[%s3 + $0xc] sm:$0xf]
    %v120 = vld [vmem:[%s3 + $0x10] sm:$0xf]
    %v121 = vld [vmem:[%s3 + $0x14] sm:$0xf]
    %v122 = vld [vmem:[%s3 + $0x18] sm:$0xf]
    %v123 = vld [vmem:[%s3 + $0x1c] sm:$0xf]
    %v124 = vld [vmem:[%s3 + $0x20] sm:$0xf]
    %v125 = vld [vmem:[%s3 + $0x24] sm:$0xf]
    %v126 = vld [vmem:[%s3 + $0x28] sm:$0xf]
    %v127 = vld [vmem:[%s3 + $0x2c] sm:$0xf]
    %v128 = vld [vmem:[%s3 + $0x30] sm:$0xf]
    %v129 = vld [vmem:[%s3 + $0x34] sm:$0xf]
    %v130 = vld [vmem:[%s3 + $0x38] sm:$0xf]
    %v131 = vld [vmem:[%s3 + $0x3c] sm:$0xf]
    %v132 = vld [vmem:[%s4] sm:$0x1]
    %v134 = vlaneseq
    %v135 = vshrl.u32 %v134, 7
    %v136 = vsub.s32 0, %v135
    %v137 = vrot.slane %v132, %v136
    %v155 = vunpack.c.l.b16 %v116
    %v156 = vunpack.c.l.b16 %v117
    %v157 = vunpack.c.l.b16 %v118
    %v158 = vunpack.c.l.b16 %v119
    %v159 = vunpack.c.l.b16 %v120
    %v160 = vunpack.c.l.b16 %v121
    %v161 = vunpack.c.l.b16 %v122
    %v162 = vunpack.c.l.b16 %v123
    %v163 = vunpack.c.l.b16 %v124
    %v164 = vunpack.c.l.b16 %v125
    %v165 = vunpack.c.l.b16 %v126
    %v166 = vunpack.c.l.b16 %v127
    %v167 = vunpack.c.l.b16 %v128
    %v168 = vunpack.c.l.b16 %v129
    %v169 = vunpack.c.l.b16 %v130
    %v170 = vunpack.c.l.b16 %v131
    %v171 = vpack.c.b16 %v156, %v155
    %v172 = vpack.c.b16 %v158, %v157
    %v173 = vpack.c.b16 %v160, %v159
    %v174 = vpack.c.b16 %v162, %v161
    %v175 = vpack.c.b16 %v164, %v163
    %v176 = vpack.c.b16 %v166, %v165
    %v177 = vpack.c.b16 %v168, %v167
    %v178 = vpack.c.b16 %v170, %v169
    %187 = vmatprep.subr.bf16.mxu0 0
    %188 = vmatpush1.bf16.msra.mxu0 %v171
    %189 = vmatprep.subr.bf16.mxu0 0
    %190 = vmatpush1.bf16.msra.mxu0 %v172
    %191 = vmatprep.subr.bf16.mxu0 0
    %192 = vmatpush1.bf16.msra.mxu0 %v173
    %193 = vmatprep.subr.bf16.mxu0 0
    %194 = vmatpush1.bf16.msra.mxu0 %v174
    %195 = vmatprep.subr.bf16.mxu0 0
    %196 = vmatpush1.bf16.msra.mxu0 %v175
    %197 = vmatprep.subr.bf16.mxu0 0
    %198 = vmatpush1.bf16.msra.mxu0 %v176
    %199 = vmatprep.subr.bf16.mxu0 0
    %200 = vmatpush1.bf16.msra.mxu0 %v177
    %201 = vmatprep.subr.bf16.mxu0 0
    %202 = vmatpush1.bf16.msra.mxu0 %v178
    %203 = vmatprep.subr.bf16.mxu0 0
    %204 = vmatpush1.bf16.msra.mxu0 0
    %205 = vmatprep.subr.bf16.mxu0 0
    %206 = vmatpush1.bf16.msra.mxu0 0
    %207 = vmatprep.subr.bf16.mxu0 0
    %208 = vmatpush1.bf16.msra.mxu0 0
    %209 = vmatprep.subr.bf16.mxu0 0
    %210 = vmatpush1.bf16.msra.mxu0 0
    %211 = vmatprep.subr.bf16.mxu0 0
    %212 = vmatpush1.bf16.msra.mxu0 0
    %213 = vmatprep.subr.bf16.mxu0 0
    %214 = vmatpush1.bf16.msra.mxu0 0
    %215 = vmatprep.subr.bf16.mxu0 0
    %216 = vmatpush1.bf16.msra.mxu0 0
    %217 = vmatprep.subr.bf16.mxu0 0
    %218 = vmatpush1.bf16.msra.mxu0 0
    %219 = vmatprep.mubr.bf16.mxu0 0
    %220 = vmatmul.mubr.bf16.gmra.mrb[0].mxu0 %v115
    %v221 = vpop.f32.mrb[0].mxu0
    %v222 = vadd.f32 %v137, %v221
    %v223 = vpop.f32.mrb[0].mxu0
    %v224 = vpop.f32.mrb[0].mxu0
    %v225 = vpop.f32.mrb[0].mxu0
    %226 = vdwg.mxu0
    %v227 = vmax.f32 %v222, 0.0
    %v228 = vpack.c.bf16 %v227, %v227
    %v229 = vld [vmem:[%s5] sm:$0xf]
    %v230 = vld [vmem:[%s5 + $0x4] sm:$0xf]
    %v231 = vld [vmem:[%s5 + $0x8] sm:$0xf]
    %v232 = vld [vmem:[%s5 + $0xc] sm:$0xf]
    %v233 = vld [vmem:[%s5 + $0x10] sm:$0xf]
    %v234 = vld [vmem:[%s5 + $0x14] sm:$0xf]
    %v235 = vld [vmem:[%s5 + $0x18] sm:$0xf]
    %v236 = vld [vmem:[%s5 + $0x1c] sm:$0xf]
    %v237 = vld [vmem:[%s6] sm:$0x1]
    %v239 = vlaneseq
    %v240 = vshrl.u32 %v239, 7
    %v241 = vsub.s32 0, %v240
    %v242 = vrot.slane %v237, %v241
    %v252 = vunpack.c.l.b16 %v229
    %v253 = vunpack.c.l.b16 %v230
    %v254 = vunpack.c.l.b16 %v231
    %v255 = vunpack.c.l.b16 %v232
    %v256 = vunpack.c.l.b16 %v233
    %v257 = vunpack.c.l.b16 %v234
    %v258 = vunpack.c.l.b16 %v235
    %v259 = vunpack.c.l.b16 %v236
    %v260 = vpack.c.b16 %v253, %v252
    %v261 = vpack.c.b16 %v255, %v254
    %v262 = vpack.c.b16 %v257, %v256
    %v263 = vpack.c.b16 %v259, %v258
    %vm268 = vcmask 523264
    %v270 = vsel %vm268, %v228, 0
    %272 = vmatprep.subr.bf16.mxu0 0
    %273 = vmatpush1.bf16.msra.mxu0 %v260
    %274 = vmatprep.subr.bf16.mxu0 0
    %275 = vmatpush1.bf16.msra.mxu0 %v261
    %276 = vmatprep.subr.bf16.mxu0 0
    %277 = vmatpush1.bf16.msra.mxu0 %v262
    %278 = vmatprep.subr.bf16.mxu0 0
    %279 = vmatpush1.bf16.msra.mxu0 %v263
    %280 = vmatprep.subr.bf16.mxu0 0
    %281 = vmatpush1.bf16.msra.mxu0 0
    %282 = vmatprep.subr.bf16.mxu0 0
    %283 = vmatpush1.bf16.msra.mxu0 0
    %284 = vmatprep.subr.bf16.mxu0 0
    %285 = vmatpush1.bf16.msra.mxu0 0
    %286 = vmatprep.subr.bf16.mxu0 0
    %287 = vmatpush1.bf16.msra.mxu0 0
    %288 = vmatprep.subr.bf16.mxu0 0
    %289 = vmatpush1.bf16.msra.mxu0 0
    %290 = vmatprep.subr.bf16.mxu0 0
    %291 = vmatpush1.bf16.msra.mxu0 0
    %292 = vmatprep.subr.bf16.mxu0 0
    %293 = vmatpush1.bf16.msra.mxu0 0
    %294 = vmatprep.subr.bf16.mxu0 0
    %295 = vmatpush1.bf16.msra.mxu0 0
    %296 = vmatprep.subr.bf16.mxu0 0
    %297 = vmatpush1.bf16.msra.mxu0 0
    %298 = vmatprep.subr.bf16.mxu0 0
    %299 = vmatpush1.bf16.msra.mxu0 0
    %300 = vmatprep.subr.bf16.mxu0 0
    %301 = vmatpush1.bf16.msra.mxu0 0
    %302 = vmatprep.subr.bf16.mxu0 0
    %303 = vmatpush1.bf16.msra.mxu0 0
    %304 = vmatprep.mubr.bf16.mxu0 0
    %305 = vmatmul.mubr.bf16.gmra.mrb[0].mxu0 %v270
    %v306 = vpop.f32.mrb[0].mxu0
    %v307 = vadd.f32 %v242, %v306
    %v308 = vpop.f32.mrb[0].mxu0
    %v309 = vpop.f32.mrb[0].mxu0
    %v310 = vpop.f32.mrb[0].mxu0
    %311 = vdwg.mxu0
    %v312 = vpack.c.bf16 %v307, %v307
    %v313 = vld [vmem:[%s7] sm:$0xf]
    %v314 = vld [vmem:[%s7 + $0x4] sm:$0xf]
    %v315 = vld [vmem:[%s7 + $0x8] sm:$0xf]
    %v316 = vld [vmem:[%s7 + $0xc] sm:$0xf]
    %v317 = vld [vmem:[%s7 + $0x10] sm:$0xf]
    %v318 = vld [vmem:[%s7 + $0x14] sm:$0xf]
    %v319 = vld [vmem:[%s7 + $0x18] sm:$0xf]
    %v320 = vld [vmem:[%s7 + $0x1c] sm:$0xf]
    %v321 = vld [vmem:[%s8] sm:$0x1]
    %v323 = vlaneseq
    %v324 = vshrl.u32 %v323, 7
    %v325 = vsub.s32 0, %v324
    %v326 = vrot.slane %v321, %v325
    %v336 = vunpack.c.l.b16 %v313
    %v337 = vunpack.c.l.b16 %v314
    %v338 = vunpack.c.l.b16 %v315
    %v339 = vunpack.c.l.b16 %v316
    %v340 = vunpack.c.l.b16 %v317
    %v341 = vunpack.c.l.b16 %v318
    %v342 = vunpack.c.l.b16 %v319
    %v343 = vunpack.c.l.b16 %v320
    %v344 = vpack.c.b16 %v337, %v336
    %v345 = vpack.c.b16 %v339, %v338
    %v346 = vpack.c.b16 %v341, %v340
    %v347 = vpack.c.b16 %v343, %v342
    %v353 = vsel %vm268, %v312, 0
    %355 = vmatprep.subr.bf16.mxu0 0
    %356 = vmatpush1.bf16.msra.mxu0 %v344
    %357 = vmatprep.subr.bf16.mxu0 0
    %358 = vmatpush1.bf16.msra.mxu0 %v345
    %359 = vmatprep.subr.bf16.mxu0 0
    %360 = vmatpush1.bf16.msra.mxu0 %v346
    %361 = vmatprep.subr.bf16.mxu0 0
    %362 = vmatpush1.bf16.msra.mxu0 %v347
    %363 = vmatprep.subr.bf16.mxu0 0
    %364 = vmatpush1.bf16.msra.mxu0 0
    %365 = vmatprep.subr.bf16.mxu0 0
    %366 = vmatpush1.bf16.msra.mxu0 0
    %367 = vmatprep.subr.bf16.mxu0 0
    %368 = vmatpush1.bf16.msra.mxu0 0
    %369 = vmatprep.subr.bf16.mxu0 0
    %370 = vmatpush1.bf16.msra.mxu0 0
    %371 = vmatprep.subr.bf16.mxu0 0
    %372 = vmatpush1.bf16.msra.mxu0 0
    %373 = vmatprep.subr.bf16.mxu0 0
    %374 = vmatpush1.bf16.msra.mxu0 0
    %375 = vmatprep.subr.bf16.mxu0 0
    %376 = vmatpush1.bf16.msra.mxu0 0
    %377 = vmatprep.subr.bf16.mxu0 0
    %378 = vmatpush1.bf16.msra.mxu0 0
    %379 = vmatprep.subr.bf16.mxu0 0
    %380 = vmatpush1.bf16.msra.mxu0 0
    %381 = vmatprep.subr.bf16.mxu0 0
    %382 = vmatpush1.bf16.msra.mxu0 0
    %383 = vmatprep.subr.bf16.mxu0 0
    %384 = vmatpush1.bf16.msra.mxu0 0
    %385 = vmatprep.subr.bf16.mxu0 0
    %386 = vmatpush1.bf16.msra.mxu0 0
    %387 = vmatprep.mubr.bf16.mxu0 0
    %388 = vmatmul.mubr.bf16.gmra.mrb[0].mxu0 %v353
    %v389 = vpop.f32.mrb[0].mxu0
    %v390 = vadd.f32 %v326, %v389
    %v391 = vpop.f32.mrb[0].mxu0
    %v392 = vpop.f32.mrb[0].mxu0
    %v393 = vpop.f32.mrb[0].mxu0
    %394 = vdwg.mxu0
    %v395 = vmax.f32 %v390, 0.0
    %v396 = vpack.c.bf16 %v395, %v395
    %v397 = vld [vmem:[#allocation2] sm:$0xff]
    %v398 = vld [vmem:[#allocation2 + $0x8] sm:$0xff]
    %v399 = vld [vmem:[#allocation2 + $0x10] sm:$0xff]
    %v400 = vld [vmem:[#allocation2 + $0x18] sm:$0xff]
    %v401 = vld [vmem:[#allocation2 + $0x20] sm:$0xff]
    %v402 = vld [vmem:[#allocation2 + $0x28] sm:$0xff]
    %v403 = vld [vmem:[#allocation2 + $0x30] sm:$0xff]
    %v404 = vld [vmem:[#allocation2 + $0x38] sm:$0xff]
    %v405 = vld [vmem:[#allocation2 + $0x40] sm:$0xff]
    %v406 = vld [vmem:[#allocation2 + $0x48] sm:$0xff]
    %v407 = vld [vmem:[#allocation2 + $0x50] sm:$0xff]
    %v408 = vld [vmem:[#allocation2 + $0x58] sm:$0xff]
    %v409 = vld [vmem:[#allocation2 + $0x60] sm:$0xff]
    %v410 = vld [vmem:[#allocation2 + $0x68] sm:$0xff]
    %v411 = vld [vmem:[#allocation2 + $0x70] sm:$0xff]
    %v412 = vld [vmem:[#allocation2 + $0x78] sm:$0xff]
    %v413 = vld [vmem:[#allocation2 + $0x80] sm:$0xff]
    %v414 = vld [vmem:[#allocation2 + $0x88] sm:$0xff]
    %v415 = vld [vmem:[#allocation2 + $0x90] sm:$0xff]
    %v416 = vld [vmem:[#allocation2 + $0x98] sm:$0xff]
    %v417 = vld [vmem:[#allocation2 + $0xa0] sm:$0xff]
    %v418 = vld [vmem:[#allocation2 + $0xa8] sm:$0xff]
    %v419 = vld [vmem:[#allocation2 + $0xb0] sm:$0xff]
    %v420 = vld [vmem:[#allocation2 + $0xb8] sm:$0xff]
    %v421 = vld [vmem:[#allocation2 + $0xc0] sm:$0xff]
    %v422 = vld [vmem:[#allocation2 + $0xc8] sm:$0xff]
    %v423 = vld [vmem:[#allocation2 + $0xd0] sm:$0xff]
    %v424 = vld [vmem:[#allocation2 + $0xd8] sm:$0xff]
    %v425 = vld [vmem:[#allocation2 + $0xe0] sm:$0xff]
    %v426 = vld [vmem:[#allocation2 + $0xe8] sm:$0xff]
    %v427 = vld [vmem:[#allocation2 + $0xf0] sm:$0xff]
    %v428 = vld [vmem:[#allocation2 + $0xf8] sm:$0xff]
    %v429 = vld [vmem:[%s10] sm:$0xf]
    %v431 = vlaneseq
    %v432 = vshrl.u32 %v431, 7
    %v433 = vsub.s32 0, %v432
    %v434 = vrot.slane %v429, %v433
    %v435 = vlaneseq
    %v436 = vshrl.u32 %v435, 7
    %v437 = vsub.s32 1, %v436
    %v438 = vrot.slane %v429, %v437
    %v439 = vlaneseq
    %v440 = vshrl.u32 %v439, 7
    %v441 = vsub.s32 2, %v440
    %v442 = vrot.slane %v429, %v441
    %v443 = vlaneseq
    %v444 = vshrl.u32 %v443, 7
    %v445 = vsub.s32 3, %v444
    %v446 = vrot.slane %v429, %v445
    %v483 = vunpack.c.l.b16 %v397
    %v484 = vunpack.c.h.b16 %v397
    %v485 = vunpack.c.l.b16 %v398
    %v486 = vunpack.c.h.b16 %v398
    %v487 = vunpack.c.l.b16 %v399
    %v488 = vunpack.c.h.b16 %v399
    %v489 = vunpack.c.l.b16 %v400
    %v490 = vunpack.c.h.b16 %v400
    %v491 = vunpack.c.l.b16 %v401
    %v492 = vunpack.c.h.b16 %v401
    %v493 = vunpack.c.l.b16 %v402
    %v494 = vunpack.c.h.b16 %v402
    %v495 = vunpack.c.l.b16 %v403
    %v496 = vunpack.c.h.b16 %v403
    %v497 = vunpack.c.l.b16 %v404
    %v498 = vunpack.c.h.b16 %v404
    %v499 = vunpack.c.l.b16 %v405
    %v500 = vunpack.c.h.b16 %v405
    %v501 = vunpack.c.l.b16 %v406
    %v502 = vunpack.c.h.b16 %v406
    %v503 = vunpack.c.l.b16 %v407
    %v504 = vunpack.c.h.b16 %v407
    %v505 = vunpack.c.l.b16 %v408
    %v506 = vunpack.c.h.b16 %v408
    %v507 = vunpack.c.l.b16 %v409
    %v508 = vunpack.c.h.b16 %v409
    %v509 = vunpack.c.l.b16 %v410
    %v510 = vunpack.c.h.b16 %v410
    %v511 = vunpack.c.l.b16 %v411
    %v512 = vunpack.c.h.b16 %v411
    %v513 = vunpack.c.l.b16 %v412
    %v514 = vunpack.c.h.b16 %v412
    %v515 = vunpack.c.l.b16 %v413
    %v516 = vunpack.c.h.b16 %v413
    %v517 = vunpack.c.l.b16 %v414
    %v518 = vunpack.c.h.b16 %v414
    %v519 = vunpack.c.l.b16 %v415
    %v520 = vunpack.c.h.b16 %v415
    %v521 = vunpack.c.l.b16 %v416
    %v522 = vunpack.c.h.b16 %v416
    %v523 = vunpack.c.l.b16 %v417
    %v524 = vunpack.c.h.b16 %v417
    %v525 = vunpack.c.l.b16 %v418
    %v526 = vunpack.c.h.b16 %v418
    %v527 = vunpack.c.l.b16 %v419
    %v528 = vunpack.c.h.b16 %v419
    %v529 = vunpack.c.l.b16 %v420
    %v530 = vunpack.c.h.b16 %v420
    %v531 = vunpack.c.l.b16 %v421
    %v532 = vunpack.c.h.b16 %v421
    %v533 = vunpack.c.l.b16 %v422
    %v534 = vunpack.c.h.b16 %v422
    %v535 = vunpack.c.l.b16 %v423
    %v536 = vunpack.c.h.b16 %v423
    %v537 = vunpack.c.l.b16 %v424
    %v538 = vunpack.c.h.b16 %v424
    %v539 = vunpack.c.l.b16 %v425
    %v540 = vunpack.c.h.b16 %v425
    %v541 = vunpack.c.l.b16 %v426
    %v542 = vunpack.c.h.b16 %v426
    %v543 = vunpack.c.l.b16 %v427
    %v544 = vunpack.c.h.b16 %v427
    %v545 = vunpack.c.l.b16 %v428
    %v546 = vunpack.c.h.b16 %v428
    %v547 = vpack.c.b16 %v487, %v483
    %v548 = vpack.c.b16 %v488, %v484
    %v549 = vpack.c.b16 %v489, %v485
    %v550 = vpack.c.b16 %v490, %v486
    %v551 = vpack.c.b16 %v495, %v491
    %v552 = vpack.c.b16 %v496, %v492
    %v553 = vpack.c.b16 %v497, %v493
    %v554 = vpack.c.b16 %v498, %v494
    %v555 = vpack.c.b16 %v503, %v499
    %v556 = vpack.c.b16 %v504, %v500
    %v557 = vpack.c.b16 %v505, %v501
    %v558 = vpack.c.b16 %v506, %v502
    %v559 = vpack.c.b16 %v511, %v507
    %v560 = vpack.c.b16 %v512, %v508
    %v561 = vpack.c.b16 %v513, %v509
    %v562 = vpack.c.b16 %v514, %v510
    %v563 = vpack.c.b16 %v519, %v515
    %v564 = vpack.c.b16 %v520, %v516
    %v565 = vpack.c.b16 %v521, %v517
    %v566 = vpack.c.b16 %v522, %v518
    %v567 = vpack.c.b16 %v527, %v523
    %v568 = vpack.c.b16 %v528, %v524
    %v569 = vpack.c.b16 %v529, %v525
    %v570 = vpack.c.b16 %v530, %v526
    %v571 = vpack.c.b16 %v535, %v531
    %v572 = vpack.c.b16 %v536, %v532
    %v573 = vpack.c.b16 %v537, %v533
    %v574 = vpack.c.b16 %v538, %v534
    %v575 = vpack.c.b16 %v543, %v539
    %v576 = vpack.c.b16 %v544, %v540
    %v577 = vpack.c.b16 %v545, %v541
    %v578 = vpack.c.b16 %v546, %v542
    %611 = vmatprep.subr.bf16.mxu0 %v548
    %612 = vmatpush1.bf16.msra.mxu0 %v547
    %613 = vmatprep.subr.bf16.mxu0 %v552
    %614 = vmatpush1.bf16.msra.mxu0 %v551
    %615 = vmatprep.subr.bf16.mxu0 %v556
    %616 = vmatpush1.bf16.msra.mxu0 %v555
    %617 = vmatprep.subr.bf16.mxu0 %v560
    %618 = vmatpush1.bf16.msra.mxu0 %v559
    %619 = vmatprep.subr.bf16.mxu0 %v564
    %620 = vmatpush1.bf16.msra.mxu0 %v563
    %621 = vmatprep.subr.bf16.mxu0 %v568
    %622 = vmatpush1.bf16.msra.mxu0 %v567
    %623 = vmatprep.subr.bf16.mxu0 %v572
    %624 = vmatpush1.bf16.msra.mxu0 %v571
    %625 = vmatprep.subr.bf16.mxu0 %v576
    %626 = vmatpush1.bf16.msra.mxu0 %v575
    %627 = vmatprep.subr.bf16.mxu0 0
    %628 = vmatpush1.bf16.msra.mxu0 0
    %629 = vmatprep.subr.bf16.mxu0 0
    %630 = vmatpush1.bf16.msra.mxu0 0
    %631 = vmatprep.subr.bf16.mxu0 0
    %632 = vmatpush1.bf16.msra.mxu0 0
    %633 = vmatprep.subr.bf16.mxu0 0
    %634 = vmatpush1.bf16.msra.mxu0 0
    %635 = vmatprep.subr.bf16.mxu0 0
    %636 = vmatpush1.bf16.msra.mxu0 0
    %637 = vmatprep.subr.bf16.mxu0 0
    %638 = vmatpush1.bf16.msra.mxu0 0
    %639 = vmatprep.subr.bf16.mxu0 0
    %640 = vmatpush1.bf16.msra.mxu0 0
    %641 = vmatprep.subr.bf16.mxu0 0
    %642 = vmatpush1.bf16.msra.mxu0 0
    %643 = vmatprep.mubr.bf16.mxu0 0
    %644 = vmatmul.mubr.bf16.gmra.mrb[0].mxu0 %v396
    %v645 = vpop.f32.mrb[0].mxu0
    %v646 = vadd.f32 %v434, %v645
    %v647 = vpop.f32.mrb[0].mxu0
    %v648 = vadd.f32 %v438, %v647
    %v649 = vpop.f32.mrb[0].mxu0
    %v650 = vpop.f32.mrb[0].mxu0
    %651 = vdwg.mxu0
    %652 = vmatprep.subr.bf16.mxu0 %v550
    %653 = vmatpush1.bf16.msra.mxu0 %v549
    %654 = vmatprep.subr.bf16.mxu0 %v554
    %655 = vmatpush1.bf16.msra.mxu0 %v553
    %656 = vmatprep.subr.bf16.mxu0 %v558
    %657 = vmatpush1.bf16.msra.mxu0 %v557
    %658 = vmatprep.subr.bf16.mxu0 %v562
    %659 = vmatpush1.bf16.msra.mxu0 %v561
    %660 = vmatprep.subr.bf16.mxu0 %v566
    %661 = vmatpush1.bf16.msra.mxu0 %v565
    %662 = vmatprep.subr.bf16.mxu0 %v570
    %663 = vmatpush1.bf16.msra.mxu0 %v569
    %664 = vmatprep.subr.bf16.mxu0 %v574
    %665 = vmatpush1.bf16.msra.mxu0 %v573
    %666 = vmatprep.subr.bf16.mxu0 %v578
    %667 = vmatpush1.bf16.msra.mxu0 %v577
    %668 = vmatprep.subr.bf16.mxu0 0
    %669 = vmatpush1.bf16.msra.mxu0 0
    %670 = vmatprep.subr.bf16.mxu0 0
    %671 = vmatpush1.bf16.msra.mxu0 0
    %672 = vmatprep.subr.bf16.mxu0 0
    %673 = vmatpush1.bf16.msra.mxu0 0
    %674 = vmatprep.subr.bf16.mxu0 0
    %675 = vmatpush1.bf16.msra.mxu0 0
    %676 = vmatprep.subr.bf16.mxu0 0
    %677 = vmatpush1.bf16.msra.mxu0 0
    %678 = vmatprep.subr.bf16.mxu0 0
    %679 = vmatpush1.bf16.msra.mxu0 0
    %680 = vmatprep.subr.bf16.mxu0 0
    %681 = vmatpush1.bf16.msra.mxu0 0
    %682 = vmatprep.subr.bf16.mxu0 0
    %683 = vmatpush1.bf16.msra.mxu0 0
    %684 = vmatprep.mubr.bf16.mxu0 0
    %685 = vmatmul.mubr.bf16.gmra.mrb[0].mxu0 %v396
    %v686 = vpop.f32.mrb[0].mxu0
    %v687 = vadd.f32 %v442, %v686
    %v688 = vpop.f32.mrb[0].mxu0
    %v689 = vadd.f32 %v446, %v688
    %v690 = vpop.f32.mrb[0].mxu0
    %v691 = vpop.f32.mrb[0].mxu0
    %692 = vdwg.mxu0
    %693 = vst [vmem:[%s11] sm:$0xff] %v646
    %694 = vst [vmem:[%s11 + $0x8] sm:$0xff] %v648
    %695 = vst [vmem:[%s11 + $0x10] sm:$0xff] %v687
    %696 = vst [vmem:[%s11 + $0x18] sm:$0xff] %v689
    // Predicated region
    $region50: #{_qrdqn_forward.1} parent=1 // pred_check
      _
    $region51: #{_qrdqn_forward.1} parent=1 // pred_check_branch
      %698 = sbr.rel (0) target = $region53
    $region52: #{_qrdqn_forward.1} parent=1 // pred_region
      _
    $region53: #{_qrdqn_forward.1} parent=1 // pred_fallthru
      _
    // Predicated region
    $region54: #{_qrdqn_forward.1} parent=1 // pred_check
      _
    $region55: #{_qrdqn_forward.1} parent=1 // pred_check_branch
      %700 = sbr.rel (0) target = $region57
    $region56: #{_qrdqn_forward.1} parent=1 // pred_region
      _
    $region57: #{_qrdqn_forward.1} parent=1 // pred_fallthru
      _
    %701 = vsyncpa [#allocation3], 1

</llo_original>
